<compile_context>
chip_gen: v5e
topology: v5e:2x2
jax: 0.10.0
libtpu: 0.0.40
codegen_flags: <defaults>
</compile_context>

<pallas_src>
import functools

import jax
import jax.numpy as jnp
from jax.experimental import pallas as pl
from jax.experimental.pallas import tpu as pltpu


def _fignn_readout_kernel(h_ref, w_ro_ref, b_ro_ref, out_ref, *,
                          s_scale, n, out_channels):
    """One grid step = B_TILE whole graphs.

    h_ref    : (B_TILE, n, f)      node features
    w_ro_ref : (f, C + 1)          [mlp1_w^T | mlp2_w^T] fused readout weights
    b_ro_ref : (1, C + 1)          [mlp1_b  | mlp2_b ]  fused readout bias
    out_ref  : (B_TILE, C)         pooled per-graph output
    """
    bt = h_ref.shape[0]
    f = h_ref.shape[2]

    # s == s_scale * h  (2*h for steps>=1, h for steps==0); flatten graphs so
    # the node-wise matmul runs with M = B_TILE*n rows on the MXU.
    s = h_ref[...].reshape(bt * n, f)
    if s_scale != 1.0:
        s = s * s_scale

    fused = jnp.dot(s, w_ro_ref[...], preferred_element_type=jnp.float32)
    fused = fused + b_ro_ref[...]                       # (bt*n, C+1)
    fused = fused.reshape(bt, n, out_channels + 1)

    node_out = fused[:, :, :out_channels]               # (bt, n, C)
    node_wgt = fused[:, :, out_channels:]               # (bt, n, 1)

    # Weighted pooling: VPU multiply + sublane reduce (no transpose, no skinny
    # M=1 MXU dot).  One lane-batched (B_TILE, C) store per grid step.
    out_ref[...] = jnp.sum(node_wgt * node_out, axis=1)


def batch_fignn_forward(h, adj, steps, p, *, max_b_tile=256):
    """Forward pass matching BatchFiGNN.forward(h, adj, steps)."""
    del adj  # only its size (== n) is used by the reference forward
    bs, n, f_in = h.shape
    f_out = p["w"].shape[1]
    out_channels = p["mlp1_w"].shape[0]
    assert f_in == f_out, "GRUCell(f_out, f_out) fed with h implies f_in == f_out"

    # Live-path algebra: after the loop s == 2h (steps >= 1) else s == h.
    s_scale = 2.0 if steps > 0 else 1.0

    # Fuse the two skinny readout matmuls into one (f, C+1) matmul.
    w_ro = jnp.concatenate([p["mlp1_w"].T, p["mlp2_w"].T], axis=1).astype(jnp.float32)
    b_ro = jnp.concatenate([p["mlp1_b"], p["mlp2_b"]]).reshape(1, out_channels + 1)
    b_ro = b_ro.astype(jnp.float32)

    # Batch many graphs per grid step; pad batch if it doesn't divide the tile.
    if bs <= max_b_tile:
        b_tile = bs
    else:
        b_tile = max(8, (max_b_tile // 8) * 8)  # keep output block sublane-aligned
    bs_pad = pl.cdiv(bs, b_tile) * b_tile
    hx = h.astype(jnp.float32)
    if bs_pad != bs:
        hx = jnp.pad(hx, ((0, bs_pad - bs), (0, 0), (0, 0)))

    kernel = functools.partial(_fignn_readout_kernel,
                               s_scale=s_scale, n=n, out_channels=out_channels)
    out = pl.pallas_call(
        kernel,
        out_shape=jax.ShapeDtypeStruct((bs_pad, out_channels), jnp.float32),
        grid=(bs_pad // b_tile,),
        in_specs=[
            pl.BlockSpec((b_tile, n, f_in), lambda b: (b, 0, 0)),     # h tile
            pl.BlockSpec((f_out, out_channels + 1), lambda b: (0, 0)),  # fused W
            pl.BlockSpec((1, out_channels + 1), lambda b: (0, 0)),      # fused b
        ],
        out_specs=pl.BlockSpec((b_tile, out_channels), lambda b: (b, 0)),
        compiler_params=pltpu.CompilerParams(
            dimension_semantics=("parallel",)),  # shards batch across v7x's 2 TCs
    )(hx, w_ro, b_ro)

    # torch: matmul(weight, output).squeeze() -> (bs, out_channels) for bs > 1
    return out[:bs].reshape(bs, out_channels)


def reference_forward(h, adj, steps, p):
    """Pure-JAX transcription of the PyTorch forward (for validation).

    The attention block and loop are transcribed faithfully even though their
    results never reach the output (GRU output is clobbered by `s = h + h`).
    """
    del adj
    bs, n, _ = h.shape
    attn_src = h @ p["a_src"]
    attn_dst = h @ p["a_dst"]
    attn = attn_src + jnp.swapaxes(attn_dst, 1, 2)
    attn = jnp.where(attn >= 0, attn, 0.2 * attn)          # LeakyReLU(0.2)
    attn = attn * (1.0 - jnp.eye(n))[None]                 # multiplicative (1-eye) mask
    attn = jax.nn.softmax(attn, axis=-1)
    s = h
    for _ in range(steps):
        a = s @ p["w"]
        a = attn @ a + p["bias"]
        s = h + h  # GRU output discarded by the reference (`s = h.view(...) + h`)
    output = s @ p["mlp1_w"].T + p["mlp1_b"]
    weight = jnp.swapaxes(s @ p["mlp2_w"].T + p["mlp2_b"], 1, 2)
    return jnp.squeeze(jnp.matmul(weight, output))


def init_params(key, f_in, f_out, out_channels):
    ks = jax.random.split(key, 10)
    xav = lambda k, shp: jax.random.uniform(
        k, shp, jnp.float32, -1.0, 1.0) * jnp.sqrt(6.0 / (shp[0] + shp[1]))
    inv = 1.0 / jnp.sqrt(f_out)
    uni = lambda k, shp, s: jax.random.uniform(k, shp, jnp.float32, -s, s)
    return {
        "a_src": xav(ks[0], (f_in, 1)),
        "a_dst": xav(ks[1], (f_in, 1)),
        "w": xav(ks[2], (f_in, f_out)),
        "bias": jnp.zeros((f_out,), jnp.float32),
        "gru_w_ih": uni(ks[3], (3 * f_out, f_out), inv),
        "gru_w_hh": uni(ks[4], (3 * f_out, f_out), inv),
        "gru_b_ih": uni(ks[5], (3 * f_out,), inv),
        "gru_b_hh": uni(ks[6], (3 * f_out,), inv),
        "mlp1_w": uni(ks[7], (out_channels, f_out), 1.0 / jnp.sqrt(f_out)),
        "mlp1_b": jnp.zeros((out_channels,), jnp.float32),
        "mlp2_w": uni(ks[8], (1, f_out), 1.0 / jnp.sqrt(f_out)),
        "mlp2_b": jnp.zeros((1,), jnp.float32),
    }


if __name__ == "__main__":
    bs, n, f_in, f_out, out_channels, steps = 2, 16, 32, 32, 8, 2

    key = jax.random.PRNGKey(0)
    k_h, k_adj, k_p, k_h2 = jax.random.split(key, 4)
    h = jax.random.normal(k_h, (bs, n, f_in), jnp.float32)
    adj = (jax.random.uniform(k_adj, (bs, n, n)) > 0.5).astype(jnp.float32)
    params = init_params(k_p, f_in, f_out, out_channels)

    # Main check (steps=2).
    out = batch_fignn_forward(h, adj, steps, params)
    out = jax.block_until_ready(out)
    ref = reference_forward(h, adj, steps, params)
    assert out.shape == (bs, out_channels), out.shape
    assert jnp.allclose(out, ref, rtol=1e-4, atol=1e-4), (out, ref)

    # Edge case: steps == 0 (s == h, not 2h).
    out0 = jax.block_until_ready(batch_fignn_forward(h, adj, 0, params))
    ref0 = reference_forward(h, adj, 0, params)
    assert jnp.allclose(out0, ref0, rtol=1e-4, atol=1e-4), (out0, ref0)

    # Larger batch exercising batch tiling + padding (grid > 1).
    bs2 = 20
    h2 = jax.random.normal(k_h2, (bs2, n, f_in), jnp.float32)
    adj2 = jnp.ones((bs2, n, n), jnp.float32)
    out2 = jax.block_until_ready(
        batch_fignn_forward(h2, adj2, steps, params, max_b_tile=8))
    ref2 = reference_forward(h2, adj2, steps, params)
    assert out2.shape == (bs2, out_channels), out2.shape
    assert jnp.allclose(out2, ref2, rtol=1e-4, atol=1e-4), (out2, ref2)

    print("KERNEL_OK")
</pallas_src>

<mosaic_0001>
module attributes {stable_mosaic.version = 11 : i64} {
  func.func @_fignn_readout_kernel(%arg0: i32, %arg1: memref<2x16x32xf32, #tpu.memory_space<vmem>>, %arg2: memref<32x9xf32, #tpu.memory_space<vmem>>, %arg3: memref<1x9xf32, #tpu.memory_space<vmem>>, %arg4: memref<2x8xf32, #tpu.memory_space<vmem>>) attributes {dimension_semantics = [#tpu.dimension_semantics<parallel>], iteration_bounds = array<i64: 1>, scalar_prefetch = 0 : i64, scratch_operands = 0 : i64, tpu.core_type = #tpu.core_type<tc>, window_params = [{transform_indices = @transform_0, window_bounds = array<i64: 2, 16, 32>}, {pipeline_mode = #tpu.pipeline_mode<synchronous>, transform_indices = @transform_1, window_bounds = array<i64: 32, 9>}, {pipeline_mode = #tpu.pipeline_mode<synchronous>, transform_indices = @transform_2, window_bounds = array<i64: 1, 9>}, {transform_indices = @transform_3, window_bounds = array<i64: 2, 8>}]} {
    %c0 = arith.constant 0 : index
    %c0_0 = arith.constant 0 : index
    %c0_1 = arith.constant 0 : index
    %0 = vector.load %arg1[%c0, %c0_0, %c0_1] : memref<2x16x32xf32, #tpu.memory_space<vmem>>, vector<2x16x32xf32>
    %1 = vector.shape_cast %0 : vector<2x16x32xf32> to vector<32x32xf32>
    %cst = arith.constant 2.000000e+00 : f32
    %2 = vector.broadcast %cst : f32 to vector<32x32xf32>
    %3 = arith.mulf %1, %2 : vector<32x32xf32>
    %c0_2 = arith.constant 0 : index
    %c0_3 = arith.constant 0 : index
    %4 = vector.load %arg2[%c0_2, %c0_3] : memref<32x9xf32, #tpu.memory_space<vmem>>, vector<32x9xf32>
    %cst_4 = arith.constant dense<0.000000e+00> : vector<32x9xf32>
    %5 = tpu.matmul %3, %4, %cst_4 {dimension_numbers = #tpu.dot_dimension_numbers<[1], [0], [0], [1], [0, 0, 1, 1], [], []>} : vector<32x32xf32>, vector<32x9xf32>, vector<32x9xf32> -> vector<32x9xf32>
    %c0_5 = arith.constant 0 : index
    %c0_6 = arith.constant 0 : index
    %6 = vector.load %arg3[%c0_5, %c0_6] : memref<1x9xf32, #tpu.memory_space<vmem>>, vector<1x9xf32>
    %7 = vector.broadcast %6 : vector<1x9xf32> to vector<32x9xf32>
    %8 = arith.addf %5, %7 : vector<32x9xf32>
    %9 = vector.shape_cast %8 : vector<32x9xf32> to vector<2x16x9xf32>
    %10 = vector.extract_strided_slice %9 {offsets = [0, 0, 0], sizes = [2, 16, 8], strides = [1, 1, 1]} : vector<2x16x9xf32> to vector<2x16x8xf32>
    %11 = vector.extract_strided_slice %9 {offsets = [0, 0, 8], sizes = [2, 16, 1], strides = [1, 1, 1]} : vector<2x16x9xf32> to vector<2x16x1xf32>
    %12 = vector.broadcast %11 : vector<2x16x1xf32> to vector<2x16x8xf32>
    %13 = arith.mulf %12, %10 : vector<2x16x8xf32>
    %cst_7 = arith.constant dense<0.000000e+00> : vector<2x8xf32>
    %14 = vector.multi_reduction <add>, %13, %cst_7 [1] : vector<2x16x8xf32> to vector<2x8xf32>
    %c0_8 = arith.constant 0 : index
    %c0_9 = arith.constant 0 : index
    %15 = vector.load %arg4[%c0_8, %c0_9] : memref<2x8xf32, #tpu.memory_space<vmem>>, vector<2x8xf32>
    tpu.vector_store %arg4[%c0_8, %c0_9], %14 {strides = array<i32>} : memref<2x8xf32, #tpu.memory_space<vmem>>, vector<2x8xf32>,
    return
  }
  func.func @transform_0(%arg0: i32) -> (i32, i32, i32) {
    %c0_i32 = arith.constant 0 : i32
    %c0_i32_0 = arith.constant 0 : i32
    %c0_i32_1 = arith.constant 0 : i32
    return %arg0, %c0_i32, %c0_i32_0 : i32, i32, i32
  }
  func.func @transform_1(%arg0: i32) -> (i32, i32) {
    %c0_i32 = arith.constant 0 : i32
    %c0_i32_0 = arith.constant 0 : i32
    %c0_i32_1 = arith.constant 0 : i32
    return %c0_i32, %c0_i32_0 : i32, i32
  }
  func.func @transform_2(%arg0: i32) -> (i32, i32) {
    %c0_i32 = arith.constant 0 : i32
    %c0_i32_0 = arith.constant 0 : i32
    %c0_i32_1 = arith.constant 0 : i32
    return %c0_i32, %c0_i32_0 : i32, i32
  }
  func.func @transform_3(%arg0: i32) -> (i32, i32) {
    %c0_i32 = arith.constant 0 : i32
    %c0_i32_0 = arith.constant 0 : i32
    return %arg0, %c0_i32 : i32, i32
  }
}

</mosaic_0001>

<llo_original>
// kernel: tpu_custom_call.1
$region0: #{tpu_custom_call.1}
  #allocation0 [shape = 'u32[]', space=smem, size = 0x4, offset = 0x4, fixed_abs, tag = 'smem constant byte address 0x4 - core index']
  #allocation1 [shape = 'u32[72,128]{1,0:T(1,128)}', space=vmem, size = 0x9000, scoped, tag = 'internal scratch']
  %s0 = inlined_call_operand.vmem [shape: f32[2,16,32], index: 0, kind: input, shape index: {}]
  %s1 = inlined_call_operand.vmem [shape: f32[32,9], index: 1, kind: input, shape index: {}]
  %s2 = inlined_call_operand.vmem [shape: f32[1,9], index: 2, kind: input, shape index: {}]
  %s3 = inlined_call_operand.hbm [shape: f32[2,8], index: 3, kind: output, shape index: {}]
  %s4 = sld [smem:[#allocation0]]
  $region22: #{tpu_custom_call.1} parent=0
    _
  %s6 = ssub.s32 1, %s4
  %s7 = scalar_select 0, %s6, %s4
  $region1: #{tpu_custom_call.1} parent=0
    #allocation2 [shape = 'u8[1024]{0}', space=vmem, size = 0x400, scoped, tag = 'output window, operand 0, single buffered']
    #allocation3 [shape = 's32[1]{0}', space=sflag, size = 0x4, scoped, tag = 'scoped memory for tpu_custom_call.1']
    %8 = vsyncpa [#allocation3], 0
    // Predicated region
    $region2: #{tpu_custom_call.1} parent=1 // pred_check
      _
    $region3: #{tpu_custom_call.1} parent=1 // pred_check_branch
      %10 = sbr.rel (0) target = $region5
    $region4: #{tpu_custom_call.1} parent=1 // pred_region
      _
    $region5: #{tpu_custom_call.1} parent=1 // pred_fallthru
      _
    // Predicated region
    $region6: #{tpu_custom_call.1} parent=1 // pred_check
      _
    $region7: #{tpu_custom_call.1} parent=1 // pred_check_branch
      %12 = sbr.rel (0) target = $region9
    $region8: #{tpu_custom_call.1} parent=1 // pred_region
      _
    $region9: #{tpu_custom_call.1} parent=1 // pred_fallthru
      _
    // Predicated region
    $region10: #{tpu_custom_call.1} parent=1 // pred_check
      _
    $region11: #{tpu_custom_call.1} parent=1 // pred_check_branch
      %14 = sbr.rel (0) target = $region13
    $region12: #{tpu_custom_call.1} parent=1 // pred_region
      _
    $region13: #{tpu_custom_call.1} parent=1 // pred_fallthru
      _
    %v15 = vld [vmem:[%s0] sm:$0xff]
    %v16 = vld [vmem:[%s0 + $0x8] sm:$0xff]
    %v17 = vld [vmem:[%s0 + $0x10] sm:$0xff]
    %v18 = vld [vmem:[%s0 + $0x18] sm:$0xff]
    %v19 = vmul.f32 %v15, 2.0
    %v20 = vmul.f32 %v16, 2.0
    %v21 = vmul.f32 %v17, 2.0
    %v22 = vmul.f32 %v18, 2.0
    %v23 = vld [vmem:[%s1] sm:$0xff]
    %v24 = vld [vmem:[%s1 + $0x8] sm:$0xff]
    %v25 = vld [vmem:[%s1 + $0x10] sm:$0xff]
    %v26 = vld [vmem:[%s1 + $0x18] sm:$0xff]
    %v27 = vld [vmem:[%s2] sm:$0x1]
    %v29 = vperm.slane %v27, 0
    %vm31 = vcmask 261120
    %v33 = vsel %vm31, %v19, 0
    %v36 = vsel %vm31, %v20, 0
    %v39 = vsel %vm31, %v21, 0
    %v42 = vsel %vm31, %v22, 0
    %44 = vmatpush.msra.mxu0 0.0
    %45 = vmatpush.msra.mxu0 0.0
    %46 = vmatpush.msra.mxu0 0.0
    %47 = vmatpush.msra.mxu0 0.0
    %48 = vmatpush.msra.mxu0 0.0
    %49 = vmatpush.msra.mxu0 0.0
    %50 = vmatpush.msra.mxu0 0.0
    %51 = vmatpush.msra.mxu0 0.0
    %52 = vmatpush.msra.mxu0 0.0
    %53 = vmatpush.msra.mxu0 0.0
    %54 = vmatpush.msra.mxu0 0.0
    %55 = vmatpush.msra.mxu0 0.0
    %56 = vmatpush.msra.mxu0 %v26
    %57 = vmatpush.msra.mxu0 %v25
    %58 = vmatpush.msra.mxu0 %v24
    %59 = vmatpush.msra.mxu0 %v23
    %60 = vmatmul.f32.gmra.mxu0 %v33
    %v61 = vpop.f32.mrf.mxu0
    %v62 = vadd.f32 %v29, %v61
    %63 = vmatmul.f32.gmra.mxu0 %v36
    %v64 = vpop.f32.mrf.mxu0
    %v65 = vadd.f32 %v29, %v64
    %66 = vmatmul.f32.gmra.mxu0 %v39
    %v67 = vpop.f32.mrf.mxu0
    %v68 = vadd.f32 %v29, %v67
    %69 = vmatmul.f32.gmra.mxu0 %v42
    %v70 = vpop.f32.mrf.mxu0
    %v71 = vadd.f32 %v29, %v70
    %72 = vdwg.mxu0
    %74 = vset.pattern.permute.xlu0 8
    %75 = vperm.xlu0 %74, %v62
    %v76 = vpop.permute.xlu0 %75
    %79 = vset.pattern.permute.xlu0 8
    %80 = vperm.xlu0 %79, %v65
    %v81 = vpop.permute.xlu0 %80
    %84 = vset.pattern.permute.xlu0 8
    %85 = vperm.xlu0 %84, %v68
    %v86 = vpop.permute.xlu0 %85
    %89 = vset.pattern.permute.xlu0 8
    %90 = vperm.xlu0 %89, %v71
    %v91 = vpop.permute.xlu0 %90
    %v93 = vmul.f32 %v76, %v62
    %v94 = vmul.f32 %v81, %v65
    %v95 = vmul.f32 %v86, %v68
    %v96 = vmul.f32 %v91, %v71
    %vm97 = vcmask 64512
    %v98 = vsel %vm97, %v93, 0.0
    %v99 = vsel %vm97, %v94, 0.0
    %v100 = vadd.f32 %v98, %v99
    %v101 = vrot.slane %v100, 4
    %v102 = vadd.f32 %v100, %v101
    %v103 = vrot.slane %v102, 2
    %v104 = vadd.f32 %v102, %v103
    %v105 = vrot.slane %v104, 1
    %v106 = vadd.f32 %v104, %v105
    %v107 = vsel %vm97, %v95, 0.0
    %v108 = vsel %vm97, %v96, 0.0
    %v109 = vadd.f32 %v107, %v108
    %v110 = vrot.slane %v109, 4
    %v111 = vadd.f32 %v109, %v110
    %v112 = vrot.slane %v111, 2
    %v113 = vadd.f32 %v111, %v112
    %v114 = vrot.slane %v113, 1
    %v115 = vadd.f32 %v113, %v114
    %vm118 = vcmask 1041409
    %v119 = vsel %vm118, %v115, %v106
    %vm121 = vcmask 58368
    %122 = vst.msk [vmem:[#allocation2] sm:$0x3] %vm121, %v119
    // Predicated region
    $region14: #{tpu_custom_call.1} parent=1 // pred_check
      _
    $region15: #{tpu_custom_call.1} parent=1 // pred_check_branch
      %124 = sbr.rel (0) target = $region17
    $region16: #{tpu_custom_call.1} parent=1 // pred_region
      %126 = vsyncadd [#allocation3], 0
      %s128 = sshll.u32 [#allocation2], 4
      %s129 = int_to_ptr.vmem [resolvable:$true] %s128
      %s130 = sshll.u32 %s3, 4
      %s131 = int_to_ptr.hbm [resolvable:$true] %s130
      %133 = dma.vmem_to_hbm [thread:$0]  %s129, 32, %s131, [#allocation3]
    $region17: #{tpu_custom_call.1} parent=1 // pred_fallthru
      _
    // Predicated region
    $region18: #{tpu_custom_call.1} parent=1 // pred_check
      _
    $region19: #{tpu_custom_call.1} parent=1 // pred_check_branch
      %135 = sbr.rel (0) target = $region21
    $region20: #{tpu_custom_call.1} parent=1 // pred_region
      %137 = dma.done [#allocation3], 32
    $region21: #{tpu_custom_call.1} parent=1 // pred_fallthru
      _
    %138 = vsyncpa [#allocation3], 1

</llo_original>
